<compile_context>
chip_gen: v5e
topology: v5e:2x2
jax: 0.10.0
libtpu: 0.0.40
codegen_flags: <defaults>
</compile_context>

<pallas_src>
import functools

import jax
import jax.numpy as jnp
from jax import lax
from jax.experimental import pallas as pl
from jax.experimental.pallas import tpu as pltpu

PAD_INDEX = 0  # ignore_index of the module (class 0 is never scored)
_NEG_LARGE = -1e30  # Python float -> literal, NOT a captured traced constant


def _wce_kernel(logits_ref, trg_ref, loss_ref, m_ref, l_ref, tgt_ref, *,
                vocab_size, tile_v, ragged_v):
    """Online-logsumexp cross-entropy over vocab tiles.

    logits_ref: (TN, TV) input-dtype VMEM tile (one vocab slice of TN tokens)
    trg_ref:    (TN, 1)  int32 VMEM tile (same block for every vocab step)
    loss_ref:   (TN, 1)  f32 per-token masked loss (written at last vocab step)
    m_ref/l_ref/tgt_ref: (TN, 1) f32 VMEM scratch (running max / sum / tgt logit)
    """
    j = pl.program_id(1)
    nvj = pl.num_programs(1)

    @pl.when(j == 0)
    def _():
        m_ref[...] = jnp.full(m_ref.shape, _NEG_LARGE, jnp.float32)
        l_ref[...] = jnp.zeros_like(l_ref)
        tgt_ref[...] = jnp.zeros_like(tgt_ref)

    x = logits_ref[...].astype(jnp.float32)            # (TN, TV) f32 compute
    t = trg_ref[...]                                    # (TN, 1) int32
    tn, tv = x.shape

    # Local lane ids only; no global-vocab-id add on the hot path.
    lane_ids = lax.broadcasted_iota(jnp.int32, (tn, tv), 1)

    if ragged_v:
        # Only traced when V % tile_v != 0: mask lanes past the real vocab.
        valid_lanes = vocab_size - j * tile_v           # scalar
        xm = jnp.where(lane_ids < valid_lanes, x, _NEG_LARGE)
    else:
        xm = x                                          # no compare/select at all

    # Online log-sum-exp update (degenerates gracefully when nvj == 1).
    m_new = jnp.maximum(m_ref[...], jnp.max(xm, axis=-1, keepdims=True))
    alpha = jnp.exp(m_ref[...] - m_new)
    l_ref[...] = alpha * l_ref[...] + jnp.sum(jnp.exp(xm - m_new),
                                              axis=-1, keepdims=True)
    m_ref[...] = m_new

    # Target logit: one-hot compare against the per-row *local* target id
    # (t_local is (TN,1), so the per-element work is just one compare + select).
    t_local = t - j * tile_v
    onehot = lane_ids == t_local
    tgt_ref[...] = tgt_ref[...] + jnp.sum(jnp.where(onehot, x, 0.0),
                                          axis=-1, keepdims=True)

    @pl.when(j == nvj - 1)
    def _():
        valid = t != PAD_INDEX
        lse = m_ref[...] + jnp.log(l_ref[...])
        # Padded token rows carry trg == PAD_INDEX -> select 0, so garbage
        # logits in a ragged token tile never reach the output.
        loss_ref[...] = jnp.where(valid, lse - tgt_ref[...], 0.0)


def _vmem_limit_bytes():
    """Generation-aware VMEM limit: plenty on v5e/v6e, headroom on v7x (64 MiB)."""
    cap = 64 * 1024 * 1024  # smallest per-TC VMEM across supported generations
    try:
        cap = int(pltpu.get_tpu_info().vmem_capacity_bytes)
    except Exception:
        pass
    return min(40 * 1024 * 1024, (cap * 5) // 8)


def _choose_tiles(n_tokens, vocab, in_bytes):
    """Pick (tile_n, tile_v); prefer a tile_v that divides V (no edge masking)."""
    if vocab <= 16384:
        tile_v = vocab                      # whole vocab resident: one vocab step
    else:
        tile_v = 0
        for d in range(8192, 1023, -128):   # largest 128-multiple divisor <= 8192
            if vocab % d == 0:
                tile_v = d
                break
        if tile_v == 0:
            tile_v = 8192                   # ragged last tile, masked in-kernel

    # Packed-sublane multiple: 8 for f32, 16 for bf16, 32 for int8/fp8.
    sub = max(8, 32 // in_bytes)
    # Working budget covers the double-buffered input block plus the f32 / int32
    # full-tile temporaries Mosaic materializes (upcast, iota, exp, selects).
    budget = 20 * 1024 * 1024
    per_row = tile_v * (2 * in_bytes + 16)
    tile_n = min(512, max(sub, budget // per_row))
    tile_n = max(sub, (tile_n // sub) * sub)
    # Never ask for more rows than the (sublane-aligned) token count.
    tile_n = min(tile_n, ((n_tokens + sub - 1) // sub) * sub)
    return tile_n, tile_v


@jax.jit
def word_cross_entropy(logits, trg):
    """logits: (B, T, V) float (f32/bf16); trg: (B, T) int. Scalar f32 loss."""
    B, T, V = logits.shape
    N = B * T
    in_bytes = jnp.dtype(logits.dtype).itemsize
    tile_n, tile_v = _choose_tiles(N, V, in_bytes)
    n_pad = pl.cdiv(N, tile_n) * tile_n
    num_v_steps = pl.cdiv(V, tile_v)
    ragged_v = (V % tile_v) != 0

    # Logits stay in their original dtype (streamed, f32 math in-kernel);
    # only the tiny target column is padded (with PAD) for ragged token tiles.
    logits_flat = logits.reshape(N, V)
    trg_flat = trg.reshape(N).astype(jnp.int32)
    trg_pad = jnp.full((n_pad, 1), PAD_INDEX, jnp.int32).at[:N, 0].set(trg_flat)

    kernel = functools.partial(_wce_kernel, vocab_size=V, tile_v=tile_v,
                               ragged_v=ragged_v)

    cost = pl.CostEstimate(
        flops=5 * N * V,
        transcendentals=N * V,
        bytes_accessed=N * V * in_bytes + n_pad * 8,
    )

    per_token = pl.pallas_call(
        kernel,
        out_shape=jax.ShapeDtypeStruct((n_pad, 1), jnp.float32),
        grid_spec=pltpu.PrefetchScalarGridSpec(
            num_scalar_prefetch=0,
            grid=(n_pad // tile_n, num_v_steps),
            in_specs=[
                pl.BlockSpec((tile_n, tile_v), lambda i, j: (i, j)),
                pl.BlockSpec((tile_n, 1), lambda i, j: (i, 0)),
            ],
            out_specs=pl.BlockSpec((tile_n, 1), lambda i, j: (i, 0)),
            scratch_shapes=[
                pltpu.VMEM((tile_n, 1), jnp.float32),  # running max m
                pltpu.VMEM((tile_n, 1), jnp.float32),  # running sum l
                pltpu.VMEM((tile_n, 1), jnp.float32),  # target logit partial
            ],
        ),
        compiler_params=pltpu.CompilerParams(
            # Token axis is independent (shardable); vocab is the inner reduction.
            # TODO(synk): on v7x, if the profile shows one TC idle, switch the
            # token axis to pltpu.CORE_PARALLEL to guarantee the 2-TC split.
            dimension_semantics=("parallel", "arbitrary"),
            vmem_limit_bytes=_vmem_limit_bytes(),
        ),
        cost_estimate=cost,
    )(logits_flat, trg_pad)

    num_valid = jnp.sum((trg_flat != PAD_INDEX).astype(jnp.float32))
    # Matches PyTorch: mean over non-ignored tokens (NaN if every token is PAD).
    return jnp.sum(per_token) / num_valid


def _reference(logits, trg):
    """Pure-JAX reference replicating nn.CrossEntropyLoss(ignore_index=PAD_INDEX)."""
    B, T, V = logits.shape
    x = logits.reshape(B * T, V).astype(jnp.float32)
    t = trg.reshape(B * T).astype(jnp.int32)
    lse = jax.nn.logsumexp(x, axis=-1)
    tgt = jnp.take_along_axis(x, t[:, None], axis=-1)[:, 0]
    valid = t != PAD_INDEX
    per_tok = jnp.where(valid, lse - tgt, 0.0)
    return jnp.sum(per_tok) / jnp.sum(valid.astype(jnp.float32))


if __name__ == "__main__":
    key = jax.random.PRNGKey(0)
    k1, k2, k3, k4 = jax.random.split(key, 4)

    # --- Small sanity check (whole vocab in one block, f32) ---
    B, T, V = 2, 8, 32
    logits = jax.random.normal(k1, (B, T, V), dtype=jnp.float32)
    trg = jax.random.randint(k2, (B, T), minval=0, maxval=V, dtype=jnp.int32)
    trg = trg.at[0, 0].set(PAD_INDEX)
    trg = trg.at[1, -1].set(PAD_INDEX)
    trg = trg.at[0, 1].set(5)

    loss = jax.block_until_ready(word_cross_entropy(logits, trg))
    ref = _reference(logits, trg)
    assert jnp.allclose(loss, ref, rtol=1e-5, atol=1e-5), (loss, ref)

    # --- bf16 streaming path with a larger (whole-vocab-resident) vocab ---
    B2, T2, V2 = 2, 40, 4480
    logits2 = jax.random.normal(k3, (B2, T2, V2), dtype=jnp.bfloat16)
    trg2 = jax.random.randint(k4, (B2, T2), minval=0, maxval=V2, dtype=jnp.int32)
    trg2 = trg2.at[0, 0].set(PAD_INDEX)
    trg2 = trg2.at[1, 3].set(PAD_INDEX)

    loss2 = jax.block_until_ready(word_cross_entropy(logits2, trg2))
    ref2 = _reference(logits2, trg2)
    assert jnp.allclose(loss2, ref2, rtol=1e-4, atol=1e-4), (loss2, ref2)

    print("KERNEL_OK")
</pallas_src>

<mosaic_0001>
module attributes {stable_mosaic.version = 11 : i64} {
  func.func @_wce_kernel(%arg0: i32, %arg1: i32, %arg2: memref<16x32xf32, #tpu.memory_space<vmem>>, %arg3: memref<16x1xi32, #tpu.memory_space<vmem>>, %arg4: memref<16x1xf32, #tpu.memory_space<vmem>>, %arg5: memref<16x1xf32, #tpu.memory_space<vmem>>, %arg6: memref<16x1xf32, #tpu.memory_space<vmem>>, %arg7: memref<16x1xf32, #tpu.memory_space<vmem>>) attributes {dimension_semantics = [#tpu.dimension_semantics<parallel>, #tpu.dimension_semantics<arbitrary>], iteration_bounds = array<i64: 1, 1>, scalar_prefetch = 0 : i64, scratch_operands = 3 : i64, tpu.core_type = #tpu.core_type<tc>, window_params = [{transform_indices = @transform_0, window_bounds = array<i64: 16, 32>}, {transform_indices = @transform_1, window_bounds = array<i64: 16, 1>}, {transform_indices = @transform_2, window_bounds = array<i64: 16, 1>}]} {
    %c0_i32 = arith.constant 0 : i32
    %0 = arith.cmpi eq, %arg1, %c0_i32 : i32
    %1 = arith.extui %0 : i1 to i32
    %c0_i32_0 = arith.constant 0 : i32
    %2 = arith.cmpi ne, %1, %c0_i32_0 : i32
    scf.if %2 {
      %cst_23 = arith.constant -1.000000e+30 : f32
      %38 = vector.broadcast %cst_23 : f32 to vector<16x1xf32>
      %c0_24 = arith.constant 0 : index
      %c0_25 = arith.constant 0 : index
      %39 = vector.load %arg5[%c0_24, %c0_25] : memref<16x1xf32, #tpu.memory_space<vmem>>, vector<16x1xf32>
      tpu.vector_store %arg5[%c0_24, %c0_25], %38 {strides = array<i32>} : memref<16x1xf32, #tpu.memory_space<vmem>>, vector<16x1xf32>,
      %cst_26 = arith.constant 0.000000e+00 : f32
      %40 = vector.broadcast %cst_26 : f32 to vector<16x1xf32>
      %c0_27 = arith.constant 0 : index
      %c0_28 = arith.constant 0 : index
      %41 = vector.load %arg6[%c0_27, %c0_28] : memref<16x1xf32, #tpu.memory_space<vmem>>, vector<16x1xf32>
      tpu.vector_store %arg6[%c0_27, %c0_28], %40 {strides = array<i32>} : memref<16x1xf32, #tpu.memory_space<vmem>>, vector<16x1xf32>,
      %cst_29 = arith.constant 0.000000e+00 : f32
      %42 = vector.broadcast %cst_29 : f32 to vector<16x1xf32>
      %c0_30 = arith.constant 0 : index
      %c0_31 = arith.constant 0 : index
      %43 = vector.load %arg7[%c0_30, %c0_31] : memref<16x1xf32, #tpu.memory_space<vmem>>, vector<16x1xf32>
      tpu.vector_store %arg7[%c0_30, %c0_31], %42 {strides = array<i32>} : memref<16x1xf32, #tpu.memory_space<vmem>>, vector<16x1xf32>,
    } else {
    }
    %c0 = arith.constant 0 : index
    %c0_1 = arith.constant 0 : index
    %3 = vector.load %arg2[%c0, %c0_1] : memref<16x32xf32, #tpu.memory_space<vmem>>, vector<16x32xf32>
    %c0_2 = arith.constant 0 : index
    %c0_3 = arith.constant 0 : index
    %4 = vector.load %arg3[%c0_2, %c0_3] : memref<16x1xi32, #tpu.memory_space<vmem>>, vector<16x1xi32>
    %5 = tpu.iota {dimensions = array<i32: 1>} : vector<16x32xi32>
    %c0_4 = arith.constant 0 : index
    %c0_5 = arith.constant 0 : index
    %6 = vector.load %arg5[%c0_4, %c0_5] : memref<16x1xf32, #tpu.memory_space<vmem>>, vector<16x1xf32>
    %cst = arith.constant dense<0xFF800000> : vector<16xf32>
    %7 = vector.multi_reduction <maximumf>, %3, %cst [1] : vector<16x32xf32> to vector<16xf32>
    %8 = vector.shape_cast %7 : vector<16xf32> to vector<16x1xf32>
    %9 = arith.maximumf %6, %8 : vector<16x1xf32>
    %c0_6 = arith.constant 0 : index
    %c0_7 = arith.constant 0 : index
    %10 = vector.load %arg5[%c0_6, %c0_7] : memref<16x1xf32, #tpu.memory_space<vmem>>, vector<16x1xf32>
    %11 = arith.subf %10, %9 : vector<16x1xf32>
    %12 = math.exp %11 : vector<16x1xf32>
    %c0_8 = arith.constant 0 : index
    %c0_9 = arith.constant 0 : index
    %13 = vector.load %arg6[%c0_8, %c0_9] : memref<16x1xf32, #tpu.memory_space<vmem>>, vector<16x1xf32>
    %14 = arith.mulf %12, %13 : vector<16x1xf32>
    %15 = vector.broadcast %9 : vector<16x1xf32> to vector<16x32xf32>
    %16 = arith.subf %3, %15 : vector<16x32xf32>
    %17 = math.exp %16 : vector<16x32xf32>
    %cst_10 = arith.constant dense<0.000000e+00> : vector<16xf32>
    %18 = vector.multi_reduction <add>, %17, %cst_10 [1] : vector<16x32xf32> to vector<16xf32>
    %19 = vector.shape_cast %18 : vector<16xf32> to vector<16x1xf32>
    %20 = arith.addf %14, %19 : vector<16x1xf32>
    %c0_11 = arith.constant 0 : index
    %c0_12 = arith.constant 0 : index
    %21 = vector.load %arg6[%c0_11, %c0_12] : memref<16x1xf32, #tpu.memory_space<vmem>>, vector<16x1xf32>
    tpu.vector_store %arg6[%c0_11, %c0_12], %20 {strides = array<i32>} : memref<16x1xf32, #tpu.memory_space<vmem>>, vector<16x1xf32>,
    %c0_13 = arith.constant 0 : index
    %c0_14 = arith.constant 0 : index
    %22 = vector.load %arg5[%c0_13, %c0_14] : memref<16x1xf32, #tpu.memory_space<vmem>>, vector<16x1xf32>
    tpu.vector_store %arg5[%c0_13, %c0_14], %9 {strides = array<i32>} : memref<16x1xf32, #tpu.memory_space<vmem>>, vector<16x1xf32>,
    %c32_i32 = arith.constant 32 : i32
    %23 = arith.muli %arg1, %c32_i32 : i32
    %24 = vector.broadcast %23 : i32 to vector<16x1xi32>
    %25 = arith.subi %4, %24 : vector<16x1xi32>
    %26 = vector.broadcast %25 : vector<16x1xi32> to vector<16x32xi32>
    %27 = arith.cmpi eq, %5, %26 : vector<16x32xi32>
    %c0_15 = arith.constant 0 : index
    %c0_16 = arith.constant 0 : index
    %28 = vector.load %arg7[%c0_15, %c0_16] : memref<16x1xf32, #tpu.memory_space<vmem>>, vector<16x1xf32>
    %cst_17 = arith.constant 0.000000e+00 : f32
    %29 = vector.broadcast %cst_17 : f32 to vector<16x32xf32>
    %30 = arith.select %27, %3, %29 : vector<16x32xi1>, vector<16x32xf32>
    %cst_18 = arith.constant dense<0.000000e+00> : vector<16xf32>
    %31 = vector.multi_reduction <add>, %30, %cst_18 [1] : vector<16x32xf32> to vector<16xf32>
    %32 = vector.shape_cast %31 : vector<16xf32> to vector<16x1xf32>
    %33 = arith.addf %28, %32 : vector<16x1xf32>
    %c0_19 = arith.constant 0 : index
    %c0_20 = arith.constant 0 : index
    %34 = vector.load %arg7[%c0_19, %c0_20] : memref<16x1xf32, #tpu.memory_space<vmem>>, vector<16x1xf32>
    tpu.vector_store %arg7[%c0_19, %c0_20], %33 {strides = array<i32>} : memref<16x1xf32, #tpu.memory_space<vmem>>, vector<16x1xf32>,
    %c0_i32_21 = arith.constant 0 : i32
    %35 = arith.cmpi eq, %arg1, %c0_i32_21 : i32
    %36 = arith.extui %35 : i1 to i32
    %c0_i32_22 = arith.constant 0 : i32
    %37 = arith.cmpi ne, %36, %c0_i32_22 : i32
    scf.if %37 {
      %c0_i32_23 = arith.constant 0 : i32
      %38 = vector.broadcast %c0_i32_23 : i32 to vector<16x1xi32>
      %39 = arith.cmpi ne, %4, %38 : vector<16x1xi32>
      %c0_24 = arith.constant 0 : index
      %c0_25 = arith.constant 0 : index
      %40 = vector.load %arg5[%c0_24, %c0_25] : memref<16x1xf32, #tpu.memory_space<vmem>>, vector<16x1xf32>
      %c0_26 = arith.constant 0 : index
      %c0_27 = arith.constant 0 : index
      %41 = vector.load %arg6[%c0_26, %c0_27] : memref<16x1xf32, #tpu.memory_space<vmem>>, vector<16x1xf32>
      %42 = math.log %41 : vector<16x1xf32>
      %43 = arith.addf %40, %42 : vector<16x1xf32>
      %c0_28 = arith.constant 0 : index
      %c0_29 = arith.constant 0 : index
      %44 = vector.load %arg7[%c0_28, %c0_29] : memref<16x1xf32, #tpu.memory_space<vmem>>, vector<16x1xf32>
      %45 = arith.subf %43, %44 : vector<16x1xf32>
      %cst_30 = arith.constant 0.000000e+00 : f32
      %46 = vector.broadcast %cst_30 : f32 to vector<16x1xf32>
      %47 = arith.select %39, %45, %46 : vector<16x1xi1>, vector<16x1xf32>
      %c0_31 = arith.constant 0 : index
      %c0_32 = arith.constant 0 : index
      %48 = vector.load %arg4[%c0_31, %c0_32] : memref<16x1xf32, #tpu.memory_space<vmem>>, vector<16x1xf32>
      tpu.vector_store %arg4[%c0_31, %c0_32], %47 {strides = array<i32>} : memref<16x1xf32, #tpu.memory_space<vmem>>, vector<16x1xf32>,
    } else {
    }
    return
  }
  func.func @transform_0(%arg0: i32, %arg1: i32) -> (i32, i32) {
    %c0_i32 = arith.constant 0 : i32
    return %arg0, %arg1 : i32, i32
  }
  func.func @transform_1(%arg0: i32, %arg1: i32) -> (i32, i32) {
    %c0_i32 = arith.constant 0 : i32
    %c0_i32_0 = arith.constant 0 : i32
    return %arg0, %c0_i32 : i32, i32
  }
  func.func @transform_2(%arg0: i32, %arg1: i32) -> (i32, i32) {
    %c0_i32 = arith.constant 0 : i32
    %c0_i32_0 = arith.constant 0 : i32
    return %arg0, %c0_i32 : i32, i32
  }
}

</mosaic_0001>

<llo_original>
// kernel: word_cross_entropy.1
$region0: #{word_cross_entropy.1}
  #allocation0 [shape = 'u32[]', space=smem, size = 0x4, offset = 0x4, fixed_abs, tag = 'smem constant byte address 0x4 - core index']
  #allocation1 [shape = 'u32[72,128]{1,0:T(1,128)}', space=vmem, size = 0x9000, scoped, tag = 'internal scratch']
  #allocation2 [shape = 'f32[16,1]{1,0:T(8,128)}', space=vmem, size = 0x2000, scoped, tag = 'scratch operand']
  #allocation3 [shape = 'f32[16,1]{1,0:T(8,128)}', space=vmem, size = 0x2000, scoped, tag = 'scratch operand']
  #allocation4 [shape = 'f32[16,1]{1,0:T(8,128)}', space=vmem, size = 0x2000, scoped, tag = 'scratch operand']
  %s0 = inlined_call_operand.vmem [shape: f32[16,32], index: 0, kind: input, shape index: {}]
  %s1 = inlined_call_operand.vmem [shape: s32[16,1], index: 1, kind: input, shape index: {}]
  %s2 = inlined_call_operand.vmem [shape: f32[16,1], index: 2, kind: output, shape index: {}]
  %s3 = sld [smem:[#allocation0]]
  $region26: #{word_cross_entropy.1} parent=0
    _
  %s5 = ssub.s32 1, %s3
  %s6 = scalar_select 0, %s5, %s3
  // Predicated region
  $region2: #{word_cross_entropy.1} parent=0 // pred_check
    _
  $region3: #{word_cross_entropy.1} parent=0 // pred_check_branch
    %8 = sbr.rel (0) target = $region5
  $region4: #{word_cross_entropy.1} parent=0 // pred_region
    _
  $region5: #{word_cross_entropy.1} parent=0 // pred_fallthru
    _
  // Predicated region
  $region6: #{word_cross_entropy.1} parent=0 // pred_check
    _
  $region7: #{word_cross_entropy.1} parent=0 // pred_check_branch
    %10 = sbr.rel (0) target = $region9
  $region8: #{word_cross_entropy.1} parent=0 // pred_region
    _
  $region9: #{word_cross_entropy.1} parent=0 // pred_fallthru
    _
  %p11 = scmp.eq.s32.totalorder 0, 0
  // Predicated region
  $region10: #{word_cross_entropy.1} parent=0 // pred_check
    %p12 = pneg %p11
  $region11: #{word_cross_entropy.1} parent=0 // pred_check_branch
    %14 = sbr.rel (%p12) target = $region13
  $region12: #{word_cross_entropy.1} parent=0 // pred_region
    %vm15 = vcmask 7168
    %16 = vst.msk [vmem:[#allocation2] sm:$0xff] %vm15, -1e+30
    %17 = vst.msk [vmem:[#allocation2 + $0x8] sm:$0xff] %vm15, -1e+30
    %18 = vst.msk [vmem:[#allocation3] sm:$0xff] %vm15, 0.0
    %19 = vst.msk [vmem:[#allocation3 + $0x8] sm:$0xff] %vm15, 0.0
    %20 = vst.msk [vmem:[#allocation4] sm:$0xff] %vm15, 0.0
    %21 = vst.msk [vmem:[#allocation4 + $0x8] sm:$0xff] %vm15, 0.0
  $region13: #{word_cross_entropy.1} parent=0 // pred_fallthru
    _
  %v22 = vld [vmem:[%s0] sm:$0xff]
  %v23 = vld [vmem:[%s0 + $0x8] sm:$0xff]
  %v24 = vld [vmem:[%s1] sm:$0xff]
  %v25 = vld [vmem:[%s1 + $0x8] sm:$0xff]
  %v26 = vlaneseq
  %v27 = vand.u32 %v26, 127
  %v28 = vld [vmem:[#allocation2] sm:$0xff]
  %v29 = vld [vmem:[#allocation2 + $0x8] sm:$0xff]
  %vm30 = vcmask 261120
  %v31 = vsel %vm30, %v22, -inf
  %32 = vmax.xlane.f32.xlu0 %v31
  %v33 = vpop.xlane.xlu0 %32
  %v34 = vsel %vm30, %v23, -inf
  %35 = vmax.xlane.f32.xlu0 %v34
  %v36 = vpop.xlane.xlu0 %35
  %v37 = vmax.f32 %v28, %v33
  %v38 = vmax.f32 %v29, %v36
  %v39 = vsub.f32 %v28, %v37
  %v40 = vsub.f32 %v29, %v38
  %v41 = vmul.f32 %v39, 1.442695
  %v42 = vpow.pop %v41
  %v43 = vmul.f32 %v40, 1.442695
  %v44 = vpow.pop %v43
  %v45 = vld [vmem:[#allocation3] sm:$0xff]
  %v46 = vld [vmem:[#allocation3 + $0x8] sm:$0xff]
  %v47 = vmul.f32 %v42, %v45
  %v48 = vmul.f32 %v44, %v46
  %50 = vset.pattern.permute.xlu0 0
  %51 = vperm.xlu0 %50, %v37
  %v52 = vpop.permute.xlu0 %51
  %55 = vset.pattern.permute.xlu0 0
  %56 = vperm.xlu0 %55, %v38
  %v57 = vpop.permute.xlu0 %56
  %v59 = vsub.f32 %v22, %v52
  %v60 = vsub.f32 %v23, %v57
  %v61 = vmul.f32 %v59, 1.442695
  %v62 = vpow.pop %v61
  %v63 = vmul.f32 %v60, 1.442695
  %v64 = vpow.pop %v63
  %v65 = vsel %vm30, %v62, 0.0
  %66 = vadd.xlane.f32.xlu0 %v65
  %v67 = vpop.xlane.xlu0 %66
  %v68 = vsel %vm30, %v64, 0.0
  %69 = vadd.xlane.f32.xlu0 %v68
  %v70 = vpop.xlane.xlu0 %69
  %v71 = vadd.f32 %v47, %v67
  %v72 = vadd.f32 %v48, %v70
  %vm73 = vcmask 7168
  %74 = vst.msk [vmem:[#allocation3] sm:$0xff] %vm73, %v71
  %75 = vst.msk [vmem:[#allocation3 + $0x8] sm:$0xff] %vm73, %v72
  %76 = vst.msk [vmem:[#allocation2] sm:$0xff] %vm73, %v37
  %77 = vst.msk [vmem:[#allocation2 + $0x8] sm:$0xff] %vm73, %v38
  %s78 = smul.u32 0, 32
  %v79 = vstv %s78
  %v80 = vsub.s32 %v24, %v79
  %v81 = vsub.s32 %v25, %v79
  %82 = vset.pattern.permute.xlu0 0
  %83 = vperm.xlu0 %82, %v80
  %v84 = vpop.permute.xlu0 %83
  %85 = vset.pattern.permute.xlu0 0
  %86 = vperm.xlu0 %85, %v81
  %v87 = vpop.permute.xlu0 %86
  %vm88 = vcmp.eq.s32.totalorder %v27, %v84
  %vm89 = vcmp.eq.s32.totalorder %v27, %v87
  %v90 = vld [vmem:[#allocation4] sm:$0xff]
  %v91 = vld [vmem:[#allocation4 + $0x8] sm:$0xff]
  %v92 = vsel %vm88, %v22, 0.0
  %v93 = vsel %vm89, %v23, 0.0
  %v94 = vsel %vm30, %v92, 0.0
  %95 = vadd.xlane.f32.xlu0 %v94
  %v96 = vpop.xlane.xlu0 %95
  %v97 = vsel %vm30, %v93, 0.0
  %98 = vadd.xlane.f32.xlu0 %v97
  %v99 = vpop.xlane.xlu0 %98
  %v100 = vadd.f32 %v90, %v96
  %v101 = vadd.f32 %v91, %v99
  %102 = vst.msk [vmem:[#allocation4] sm:$0xff] %vm73, %v100
  %103 = vst.msk [vmem:[#allocation4 + $0x8] sm:$0xff] %vm73, %v101
  // Predicated region
  $region14: #{word_cross_entropy.1} parent=0 // pred_check
    %p104 = pneg %p11
  $region15: #{word_cross_entropy.1} parent=0 // pred_check_branch
    %106 = sbr.rel (%p104) target = $region17
  $region16: #{word_cross_entropy.1} parent=0 // pred_region
    %vm107 = vcmp.ne.s32.totalorder %v24, 0
    %vm108 = vcmp.ne.s32.totalorder %v25, 0
    %v109 = vld [vmem:[#allocation2] sm:$0xff]
    %v110 = vld [vmem:[#allocation2 + $0x8] sm:$0xff]
    %v111 = vld [vmem:[#allocation3] sm:$0xff]
    %v112 = vld [vmem:[#allocation3 + $0x8] sm:$0xff]
    %v113 = vlog2.pop %v111
    %v114 = vmul.f32 %v113, 0.6931472
    %v115 = vlog2.pop %v112
    %v116 = vmul.f32 %v115, 0.6931472
    %v117 = vadd.f32 %v109, %v114
    %v118 = vadd.f32 %v110, %v116
    %v119 = vld [vmem:[#allocation4] sm:$0xff]
    %v120 = vld [vmem:[#allocation4 + $0x8] sm:$0xff]
    %v121 = vsub.f32 %v117, %v119
    %v122 = vsub.f32 %v118, %v120
    %v123 = vsel %vm107, %v121, 0.0
    %v124 = vsel %vm108, %v122, 0.0
    %125 = vst.msk [vmem:[%s2] sm:$0xff] %vm73, %v123
    %126 = vst.msk [vmem:[%s2 + $0x8] sm:$0xff] %vm73, %v124
  $region17: #{word_cross_entropy.1} parent=0 // pred_fallthru
    _
  // Predicated region
  $region18: #{word_cross_entropy.1} parent=0 // pred_check
    _
  $region19: #{word_cross_entropy.1} parent=0 // pred_check_branch
    %128 = sbr.rel (0) target = $region21
  $region20: #{word_cross_entropy.1} parent=0 // pred_region
    _
  $region21: #{word_cross_entropy.1} parent=0 // pred_fallthru
    _
  // Predicated region
  $region22: #{word_cross_entropy.1} parent=0 // pred_check
    _
  $region23: #{word_cross_entropy.1} parent=0 // pred_check_branch
    %130 = sbr.rel (0) target = $region25
  $region24: #{word_cross_entropy.1} parent=0 // pred_region
    _
  $region25: #{word_cross_entropy.1} parent=0 // pred_fallthru
    _

</llo_original>
